<compile_context>
chip_gen: v7x
topology: tpu7x:2x2x1
jax: 0.10.0
libtpu: 0.0.40
codegen_flags: <defaults>
</compile_context>

<pallas_src>
import math
import functools

import jax
import jax.numpy as jnp
from jax.experimental import pallas as pl
from jax.experimental.pallas import tpu as pltpu


_LANE = 128
_SUBLANE = 8
_TARGET_BLOCK_BYTES = 2 << 20  # ~2 MiB/block: pipelines at the HBM roofline


# ----------------------------------------------------------------------------
# Parameter setup (glue): build the sinusoidal table exactly like the module.
# ----------------------------------------------------------------------------
def make_positional_encoding(d_model: int, max_len: int) -> jnp.ndarray:
    position = jnp.arange(max_len, dtype=jnp.float32)[:, None]              # [max_len, 1]
    div_term = jnp.exp(
        jnp.arange(0, d_model, 2, dtype=jnp.float32)
        * (-math.log(10000.0) / d_model)
    )                                                                        # [d_model//2]
    pe = jnp.zeros((max_len, d_model), dtype=jnp.float32)
    pe = pe.at[:, 0::2].set(jnp.sin(position * div_term))
    pe = pe.at[:, 1::2].set(jnp.cos(position * div_term))
    return pe                                                                # [max_len, d_model]


# ----------------------------------------------------------------------------
# Tiling helper
# ----------------------------------------------------------------------------
def _largest_divisor_tile(n: int, unit: int, max_tile: int) -> int:
    """Largest multiple-of-`unit` divisor of `n` that is <= max_tile.

    Returns `n` (full axis) if the axis already fits or no such divisor exists
    (a full-extent block is always a legal TPU block shape)."""
    if n <= max_tile or n <= unit:
        return n
    t = (min(max_tile, n) // unit) * unit
    while t >= unit:
        if n % t == 0:
            return t
        t -= unit
    return n


# ----------------------------------------------------------------------------
# Pallas kernels (2-D blocks: (rows, cols); pe broadcasts over rows if needed)
# ----------------------------------------------------------------------------
def _pe_add_kernel(x_ref, pe_ref, o_ref):
    # x_ref: (rows, cols); pe_ref: (rows, cols) or (1, cols).  pe is already in
    # x.dtype (cast once in the wrapper), so this is a straight VPU add.
    o_ref[...] = x_ref[...] + pe_ref[...]


def _pe_add_dropout_kernel(seed_ref, x_ref, pe_ref, o_ref, *,
                           keep_threshold, inv_keep_prob,
                           row_stride, base0, base1):
    """Add positional encoding, then inverted dropout (training mode).

    The dropout mask is a stateless hash of (seed, global element index), so it
    is identical regardless of tiling / which grid step touches the element.
    keep prob = 1 - p; kept values are scaled by 1/(1-p).
    # TODO(synk): dropout RNG stream cannot bit-match torch.nn.Dropout; only
    # the statistics (Bernoulli keep prob, 1/(1-p) scaling) match.
    """
    y = x_ref[...] + pe_ref[...]
    rows, cols = y.shape

    seed_u = seed_ref[0].astype(jnp.uint32)
    pid0 = pl.program_id(0).astype(jnp.uint32)
    pid1 = pl.program_id(1).astype(jnp.uint32)
    base = (pid0 * jnp.uint32(base0 & 0xFFFFFFFF)
            + pid1 * jnp.uint32(base1 & 0xFFFFFFFF))

    r = jax.lax.broadcasted_iota(jnp.uint32, (rows, cols), 0)
    c = jax.lax.broadcasted_iota(jnp.uint32, (rows, cols), 1)
    idx = base + r * jnp.uint32(row_stride & 0xFFFFFFFF) + c   # global element id

    # lowbias32-style integer mixing (pure VPU int ops; EUP/XLU/MXU untouched).
    h = idx ^ (seed_u * jnp.uint32(0x9E3779B9) + jnp.uint32(0x85EBCA6B))
    h = (h ^ (h >> 16)) * jnp.uint32(0x7FEB352D)
    h = (h ^ (h >> 15)) * jnp.uint32(0x846CA68B)
    h = h ^ (h >> 16)

    keep = h >= jnp.uint32(keep_threshold)
    scale = jnp.asarray(inv_keep_prob, dtype=y.dtype)
    o_ref[...] = jnp.where(keep, y * scale, jnp.zeros_like(y))


# ----------------------------------------------------------------------------
# Wrapper
# ----------------------------------------------------------------------------
def positional_encoding_forward(x, pe, *, dropout_p=0.1, training=False, seed=0):
    """x: [B, S, D]; pe: [max_len, D] float32 table.  Returns [B, S, D]."""
    B, S, D = x.shape
    itemsize = jnp.dtype(x.dtype).itemsize
    # Cast the table once here (halves pe DMA bytes for bf16 inputs and removes
    # a per-block cast inside the kernel).
    pe_slice = pe[:S, :].astype(x.dtype)

    p = float(min(max(dropout_p, 0.0), 1.0))
    use_dropout = training and p > 0.0
    if use_dropout and p >= 1.0:
        # Degenerate case: torch.nn.Dropout(p=1.0) zeroes everything.
        return jnp.zeros_like(x)

    if D % _LANE == 0:
        # ---- Layout A: keep [B, S, D]; D is already lane-dense. -------------
        max_rows = max(_SUBLANE, _TARGET_BLOCK_BYTES // (D * itemsize))
        tS = _largest_divisor_tile(S, _SUBLANE, max_rows)
        grid = (B, S // tS)
        xf, pe_f = x, pe_slice
        x_spec = pl.BlockSpec((None, tS, D), lambda b, s, *_: (b, s, 0))
        pe_spec = pl.BlockSpec((tS, D), lambda b, s, *_: (s, 0))
        out_spec = pl.BlockSpec((None, tS, D), lambda b, s, *_: (b, s, 0))
        out_shape = jax.ShapeDtypeStruct((B, S, D), x.dtype)
        x_block_bytes = tS * D * itemsize
        # global flat index = b*(S*D) + s*(tS*D) + (i*D + d)
        base0, base1, row_stride = S * D, tS * D, D
        unflatten = lambda o: o
    else:
        # ---- Layout B: flatten to [B, S*D] so the last dim is lane-dense ----
        # (avoids masked vst.msk partial stores when D < 128 / not a multiple
        #  of 128, e.g. the demo's D=32).
        F = S * D
        row_budget = max(_LANE * itemsize,
                         _TARGET_BLOCK_BYTES // max(1, min(B, _SUBLANE)))
        tF = _largest_divisor_tile(F, _LANE, max(_LANE, row_budget // itemsize))
        tB = _largest_divisor_tile(
            B, _SUBLANE, max(_SUBLANE, _TARGET_BLOCK_BYTES // (tF * itemsize)))
        grid = (B // tB, F // tF)        # tiny problems collapse to (1, 1)
        xf = x.reshape(B, F)
        pe_f = pe_slice.reshape(1, F)
        x_spec = pl.BlockSpec((tB, tF), lambda i, j, *_: (i, j))
        pe_spec = pl.BlockSpec((1, tF), lambda i, j, *_: (0, j))
        out_spec = pl.BlockSpec((tB, tF), lambda i, j, *_: (i, j))
        out_shape = jax.ShapeDtypeStruct((B, F), x.dtype)
        x_block_bytes = tB * tF * itemsize
        # global flat index = i*(tB*F) + j*tF + (r*F + c)
        base0, base1, row_stride = tB * F, tF, F
        unflatten = lambda o: o.reshape(B, S, D)

    total = B * S * D
    cost = pl.CostEstimate(
        flops=total * (4 if use_dropout else 1),
        transcendentals=0,
        bytes_accessed=(2 * total + S * D) * itemsize,
    )
    compiler_params = pltpu.CompilerParams(
        # Both grid axes are independent -> shard across v7x's 2 TensorCores;
        # neutral on single-TC v5e/v6e.
        dimension_semantics=("parallel", "parallel"),
        # Explicit scoped-VMEM budget with headroom (double-buffered x/pe/out
        # blocks); stays under v5e's 16 MiB default and v7x's 64 MiB physical.
        vmem_limit_bytes=int(min(max(6 * x_block_bytes + (4 << 20), 16 << 20),
                                 48 << 20)),
    )

    if not use_dropout:
        out = pl.pallas_call(
            _pe_add_kernel,
            out_shape=out_shape,
            grid_spec=pltpu.PrefetchScalarGridSpec(
                num_scalar_prefetch=0,
                grid=grid,
                in_specs=[x_spec, pe_spec],
                out_specs=out_spec,
            ),
            compiler_params=compiler_params,
            cost_estimate=cost,
        )(xf, pe_f)
        return unflatten(out)

    # Training path: in-kernel inverted dropout.  Exact 2^32 scaling of p (no
    # f32 rounding bias); element kept iff hash >= threshold (prob = 1 - p).
    keep_threshold = min(int(round(p * 4294967296.0)), 0xFFFFFFFF)
    kernel = functools.partial(
        _pe_add_dropout_kernel,
        keep_threshold=keep_threshold,
        inv_keep_prob=1.0 / (1.0 - p),
        row_stride=row_stride,
        base0=base0,
        base1=base1,
    )
    seed_arr = jnp.asarray([seed], dtype=jnp.int32)
    out = pl.pallas_call(
        kernel,
        out_shape=out_shape,
        grid_spec=pltpu.PrefetchScalarGridSpec(
            num_scalar_prefetch=1,
            grid=grid,
            in_specs=[x_spec, pe_spec],
            out_specs=out_spec,
        ),
        compiler_params=compiler_params,
        cost_estimate=cost,
    )(seed_arr, xf, pe_f)
    return unflatten(out)


# ----------------------------------------------------------------------------
# Main
# ----------------------------------------------------------------------------
if __name__ == "__main__":
    d_model = 32          # not a multiple of 128 -> exercises the flattened path
    max_len = 64
    B, S = 2, 8
    p = 0.1

    key = jax.random.PRNGKey(0)
    x = jax.random.normal(key, (B, S, d_model), dtype=jnp.float32)
    pe = make_positional_encoding(d_model, max_len)
    ref = x + pe[:S][None, :, :]

    # Eval-mode forward (dropout = identity), module.eval() semantics.
    out = jax.block_until_ready(
        positional_encoding_forward(x, pe, dropout_p=p, training=False))
    assert out.shape == (B, S, d_model)
    assert jnp.allclose(out, ref, atol=1e-6), "eval-path mismatch vs reference"

    # Also exercise the [B, S, D] lane-dense path (D a multiple of 128).
    d2 = 128
    x2 = jax.random.normal(jax.random.PRNGKey(1), (B, S, d2), dtype=jnp.float32)
    pe2 = make_positional_encoding(d2, max_len)
    out2 = jax.block_until_ready(
        positional_encoding_forward(x2, pe2, dropout_p=p, training=False))
    assert jnp.allclose(out2, x2 + pe2[:S][None, :, :], atol=1e-6)

    # Training-mode forward (in-kernel inverted dropout).
    out_tr = jax.block_until_ready(
        positional_encoding_forward(x, pe, dropout_p=p, training=True, seed=42))
    assert out_tr.shape == (B, S, d_model)
    scale = 1.0 / (1.0 - p)
    dropped = out_tr == 0.0
    kept_ok = jnp.isclose(out_tr, ref * scale, rtol=1e-5, atol=1e-5)
    assert bool(jnp.all(dropped | kept_ok)), "kept values must equal (x+pe)/(1-p)"
    frac = float(jnp.mean(dropped.astype(jnp.float32)))
    assert 0.0 < frac < 0.5, f"drop fraction {frac} implausible for p={p}"

    print("KERNEL_OK")
</pallas_src>

<mosaic_0001>
module attributes {stable_mosaic.version = 11 : i64} {
  func.func @_pe_add_kernel(%arg0: i32, %arg1: i32, %arg2: memref<2x256xf32, #tpu.memory_space<vmem>>, %arg3: memref<1x256xf32, #tpu.memory_space<vmem>>, %arg4: memref<2x256xf32, #tpu.memory_space<vmem>>) attributes {dimension_semantics = [#tpu.dimension_semantics<parallel>, #tpu.dimension_semantics<parallel>], iteration_bounds = array<i64: 1, 1>, scalar_prefetch = 0 : i64, scratch_operands = 0 : i64, tpu.core_type = #tpu.core_type<tc>, window_params = [{transform_indices = @transform_0, window_bounds = array<i64: 2, 256>}, {transform_indices = @transform_1, window_bounds = array<i64: 1, 256>}, {transform_indices = @transform_2, window_bounds = array<i64: 2, 256>}]} {
    %c0 = arith.constant 0 : index
    %c0_0 = arith.constant 0 : index
    %0 = vector.load %arg2[%c0, %c0_0] : memref<2x256xf32, #tpu.memory_space<vmem>>, vector<2x256xf32>
    %c0_1 = arith.constant 0 : index
    %c0_2 = arith.constant 0 : index
    %1 = vector.load %arg3[%c0_1, %c0_2] : memref<1x256xf32, #tpu.memory_space<vmem>>, vector<1x256xf32>
    %2 = vector.broadcast %1 : vector<1x256xf32> to vector<2x256xf32>
    %3 = arith.addf %0, %2 : vector<2x256xf32>
    %c0_3 = arith.constant 0 : index
    %c0_4 = arith.constant 0 : index
    %4 = vector.load %arg4[%c0_3, %c0_4] : memref<2x256xf32, #tpu.memory_space<vmem>>, vector<2x256xf32>
    tpu.vector_store %arg4[%c0_3, %c0_4], %3 {strides = array<i32>} : memref<2x256xf32, #tpu.memory_space<vmem>>, vector<2x256xf32>,
    return
  }
  func.func @transform_0(%arg0: i32, %arg1: i32) -> (i32, i32) {
    %c0_i32 = arith.constant 0 : i32
    return %arg0, %arg1 : i32, i32
  }
  func.func @transform_1(%arg0: i32, %arg1: i32) -> (i32, i32) {
    %c0_i32 = arith.constant 0 : i32
    %c0_i32_0 = arith.constant 0 : i32
    return %c0_i32, %arg1 : i32, i32
  }
  func.func @transform_2(%arg0: i32, %arg1: i32) -> (i32, i32) {
    %c0_i32 = arith.constant 0 : i32
    return %arg0, %arg1 : i32, i32
  }
}

</mosaic_0001>

<llo_original>
// kernel: tpu_custom_call.1
$region0: #{tpu_custom_call.1}
  #allocation0 [shape = 'u32[]', space=smem, size = 0x4, offset = 0x4, fixed_abs, tag = 'smem constant byte address 0x4 - core index']
  #allocation1 [shape = 'u32[144,128]{1,0:T(1,128)}', space=vmem, size = 0x12000, scoped, tag = 'internal scratch']
  %s0 = inlined_call_operand.hbm [shape: f32[2,256], index: 0, kind: input, shape index: {}]
  %s1 = inlined_call_operand.vmem [shape: f32[1,256], index: 1, kind: input, shape index: {}]
  %s2 = inlined_call_operand.hbm [shape: f32[2,256], index: 2, kind: output, shape index: {}]
  %s3 = sld [smem:[#allocation0]]
  $region22: #{tpu_custom_call.1} parent=0
    _
  %s5 = ssub.s32 1, %s3
  %s6 = scalar_select 0, %s5, %s3
  $region1: #{tpu_custom_call.1} parent=0
    #allocation2 [shape = 'u8[2048]{0}', space=vmem, size = 0x800, scoped, tag = 'input window, operand 0, single buffered']
    #allocation3 [shape = 's32[1]{0}', space=sflag, size = 0x4, scoped, tag = 'scoped memory for tpu_custom_call.1']
    #allocation4 [shape = 's32[1]{0}', space=sflag, size = 0x4, scoped, tag = 'scoped memory for tpu_custom_call.1']
    #allocation5 [shape = 'u8[2048]{0}', space=vmem, size = 0x800, scoped, tag = 'output window, operand 0, single buffered']
    %7 = vsyncpa [#allocation3], 0
    %8 = vsyncpa [#allocation4], 0
    // Predicated region
    $region2: #{tpu_custom_call.1} parent=1 // pred_check
      _
    $region3: #{tpu_custom_call.1} parent=1 // pred_check_branch
      %10 = sbr.rel (0) target = $region5
    $region4: #{tpu_custom_call.1} parent=1 // pred_region
      %s12 = ssub.s32 64, 64
      %13 = vsyncadd [#allocation3], %s12
      %s15 = sshll.u32 [#allocation2], 4
      %s16 = int_to_ptr.vmem [resolvable:$true] %s15
      %18 = dma.hbm_to_vmem [thread:$0]  %s0, 64, %s16, [#allocation3]
    $region5: #{tpu_custom_call.1} parent=1 // pred_fallthru
      _
    // Predicated region
    $region6: #{tpu_custom_call.1} parent=1 // pred_check
      _
    $region7: #{tpu_custom_call.1} parent=1 // pred_check_branch
      %20 = sbr.rel (0) target = $region9
    $region8: #{tpu_custom_call.1} parent=1 // pred_region
      _
    $region9: #{tpu_custom_call.1} parent=1 // pred_fallthru
      _
    // Predicated region
    $region10: #{tpu_custom_call.1} parent=1 // pred_check
      _
    $region11: #{tpu_custom_call.1} parent=1 // pred_check_branch
      %22 = sbr.rel (0) target = $region13
    $region12: #{tpu_custom_call.1} parent=1 // pred_region
      %23 = dma.done [#allocation3], 64
    $region13: #{tpu_custom_call.1} parent=1 // pred_fallthru
      _
    %v24 = vld [vmem:[#allocation2] sm:$0xf]
    %v25 = vld [vmem:[%s1] sm:$0x3]
    %v27 = vlaneseq
    %v28 = vshrl.u32 %v27, 7
    %v29 = vsub.s32 0, %v28
    %v30 = vrot.slane %v25, %v29
    %v31 = vlaneseq
    %v32 = vshrl.u32 %v31, 7
    %v33 = vsub.s32 1, %v32
    %v34 = vrot.slane %v25, %v33
    %v35 = vcombine.low %v30, %v34
    %v37 = vunpack.c.l.s4 1983009808
    %v38 = vunpack.c.0.s8 %v37
    %v39 = vlaneseq
    %v40 = vshrl.u32 %v39, 7
    %v41 = vsub.s32 %v38, %v40
    %v42 = vrot.slane %v35, %v41
    %v44 = vadd.f32 %v24, %v42
    %45 = vst [vmem:[#allocation5] sm:$0xf] %v44
    // Predicated region
    $region14: #{tpu_custom_call.1} parent=1 // pred_check
      _
    $region15: #{tpu_custom_call.1} parent=1 // pred_check_branch
      %47 = sbr.rel (0) target = $region17
    $region16: #{tpu_custom_call.1} parent=1 // pred_region
      %s49 = ssub.s32 64, 64
      %50 = vsyncadd [#allocation4], %s49
      %s52 = sshll.u32 [#allocation5], 4
      %s53 = int_to_ptr.vmem [resolvable:$true] %s52
      %55 = dma.vmem_to_hbm [thread:$0]  %s53, 64, %s2, [#allocation4]
    $region17: #{tpu_custom_call.1} parent=1 // pred_fallthru
      _
    // Predicated region
    $region18: #{tpu_custom_call.1} parent=1 // pred_check
      _
    $region19: #{tpu_custom_call.1} parent=1 // pred_check_branch
      %57 = sbr.rel (0) target = $region21
    $region20: #{tpu_custom_call.1} parent=1 // pred_region
      %58 = dma.done [#allocation4], 64
    $region21: #{tpu_custom_call.1} parent=1 // pred_fallthru
      _
    %59 = vsyncpa [#allocation3], 1
    %60 = vsyncpa [#allocation4], 1

</llo_original>
